<compile_context>
chip_gen: v7x
topology: tpu7x:2x2x1
jax: 0.10.0
libtpu: 0.0.40
codegen_flags: <defaults>
</compile_context>

<pallas_src>
import math

import jax
import jax.numpy as jnp
from jax.experimental import pallas as pl
from jax.experimental.pallas import tpu as pltpu

_LANE = 128
_MAX_LANE = 1024                      # lane-dense repack target width (review: 512-1024)
_SPLIT_THRESHOLD_BYTES = 2 << 20      # split single-block cases >=2 MiB for v7x's 2 TCs

_VMEM_CAP_CACHE = None


def _vmem_capacity_bytes():
    """Physical VMEM per TensorCore; conservative 64 MiB if the query fails."""
    global _VMEM_CAP_CACHE
    if _VMEM_CAP_CACHE is None:
        cap = None
        try:
            info = pltpu.get_tpu_info()
            cap = getattr(info, "vmem_capacity_bytes", None)
        except Exception:
            cap = None
        _VMEM_CAP_CACHE = int(cap) if cap else 64 * 1024 * 1024
    return _VMEM_CAP_CACHE


def _tile_budget():
    """(per-buffer tile cap bytes, vmem_limit_bytes) tuned per generation."""
    cap = _vmem_capacity_bytes()
    if cap >= 128 * 1024 * 1024:                 # v5e / v6e (128 MiB VMEM)
        return 8 * 1024 * 1024, 64 * 1024 * 1024
    # v7x (64 MiB VMEM per TC) or unknown: keep buffers small, limit <= 48 MiB
    limit = min(48 * 1024 * 1024, max(32 * 1024 * 1024, (cap * 3) // 4))
    return 4 * 1024 * 1024, limit


def _sublane_quantum(itemsize):
    """Sublane packing quantum: 8 rows for f32, 16 for bf16, 32 for int8/fp8."""
    return max(8, 32 // max(1, int(itemsize)))


def _pick_lane_width(total, d):
    """Largest L <= _MAX_LANE with L % lcm(d,128) == 0 and total % L == 0 (else None)."""
    base = (d * _LANE) // math.gcd(d, _LANE)     # lcm(d, 128)
    if base > total or total % base != 0:
        return None
    units = total // base
    max_m = max(1, _MAX_LANE // base)
    for m in range(min(max_m, units), 0, -1):
        if units % m == 0:
            return base * m
    return base


def _pick_row_tile(n_rows, lane_elems, itemsize, cap_bytes):
    """Row-tile (sublane dim) for a lane-dense (n_rows, lane_elems) stream."""
    quantum = _sublane_quantum(itemsize)
    row_bytes = lane_elems * itemsize
    cap_rows = (cap_bytes // max(1, row_bytes)) // quantum * quantum
    cap_rows = max(quantum, cap_rows)
    if n_rows > cap_rows:
        return cap_rows
    # Whole thing fits in one block.  If there is enough data, still use >= 2
    # blocks so both TensorCores on v7x get a share (one extra ~0.35us step).
    if n_rows >= 2 * quantum and n_rows * row_bytes >= _SPLIT_THRESHOLD_BYTES:
        half = -(-((n_rows + 1) // 2) // quantum) * quantum
        if half < n_rows:
            return half
    return n_rows


# ---------------------------------------------------------------------------
# Kernel body (shared): out = x + pe, pe row-broadcast when it has 1 row.
# ---------------------------------------------------------------------------
def _add_kernel(x_ref, pe_ref, o_ref):
    o_ref[...] = x_ref[...] + pe_ref[...]


# ---------------------------------------------------------------------------
# Path 1: seq_len < max_len  ->  out[b, s, :] = x[b, s, :] + pe_row[:]
# ---------------------------------------------------------------------------
def _add_pe_row(x, pe_row):
    B, S, D = x.shape
    total = B * S * D
    itemsize = x.dtype.itemsize
    L = _pick_lane_width(total, D)
    if L is None:
        return _add_pe_row_fallback(x, pe_row)

    cap_bytes, vmem_limit = _tile_budget()
    n_rows = total // L
    xf = x.reshape(n_rows, L)                                  # lane-dense flat view
    pe_wide = jnp.tile(pe_row.reshape(1, D), (1, L // D))      # (1, L)
    tr = _pick_row_tile(n_rows, L, itemsize, cap_bytes)

    out = pl.pallas_call(
        _add_kernel,
        out_shape=jax.ShapeDtypeStruct((n_rows, L), x.dtype),
        grid=(pl.cdiv(n_rows, tr),),
        in_specs=[
            pl.BlockSpec((tr, L), lambda i: (i, 0)),
            pl.BlockSpec((1, L), lambda i: (0, 0)),            # constant index -> VMEM-resident
        ],
        out_specs=pl.BlockSpec((tr, L), lambda i: (i, 0)),
        compiler_params=pltpu.CompilerParams(
            dimension_semantics=("parallel",),
            vmem_limit_bytes=vmem_limit,
        ),
    )(xf, pe_wide)
    return out.reshape(B, S, D)


def _add_pe_row_fallback(x, pe_row):
    """(rows, D) layout for shapes where the lane-dense repack is impossible."""
    B, S, D = x.shape
    n = B * S
    itemsize = x.dtype.itemsize
    cap_bytes, vmem_limit = _tile_budget()
    padded_lane = -(-D // _LANE) * _LANE                       # VMEM footprint pads lanes to 128
    tr = _pick_row_tile(n, padded_lane, itemsize, cap_bytes)
    assert tr * padded_lane * itemsize <= vmem_limit // 4, (
        "d_model too large for the fallback row layout; use a lane-aligned d_model")
    xf = x.reshape(n, D)
    out = pl.pallas_call(
        _add_kernel,
        out_shape=jax.ShapeDtypeStruct((n, D), x.dtype),
        grid=(pl.cdiv(n, tr),),
        in_specs=[
            pl.BlockSpec((tr, D), lambda i: (i, 0)),
            pl.BlockSpec((1, D), lambda i: (0, 0)),
        ],
        out_specs=pl.BlockSpec((tr, D), lambda i: (i, 0)),
        compiler_params=pltpu.CompilerParams(
            dimension_semantics=("parallel",),
            vmem_limit_bytes=vmem_limit,
        ),
    )(xf, pe_row.reshape(1, D))
    return out.reshape(B, S, D)


# ---------------------------------------------------------------------------
# Path 2: seq_len > max_len  ->  out[b, s, :] = x[b, s, :] + pe[s, :]
# ---------------------------------------------------------------------------
def _add_pe_table(x, pe):
    B, S, D = x.shape
    SD = S * D
    itemsize = x.dtype.itemsize
    if SD % _LANE != 0:
        return _add_pe_table_fallback(x, pe)

    quantum = _sublane_quantum(itemsize)
    cap_bytes, vmem_limit = _tile_budget()
    xf = x.reshape(B, SD)                                      # lane-dense: (batch, seq*feat)
    pef = pe.reshape(1, SD)

    # lane tile: large multiple of 128 such that a quantum-high block stays
    # within ~half the per-buffer cap (leaves room for a tall batch tile).
    max_tl = ((cap_bytes // 2) // (quantum * itemsize)) // _LANE * _LANE
    tl = min(SD, max(_LANE, max_tl))
    max_tb = max(quantum, (cap_bytes // (tl * itemsize)) // quantum * quantum)
    tb = B if B <= max_tb else max_tb

    grid = (pl.cdiv(SD, tl), pl.cdiv(B, tb))  # lane outer, batch inner -> pe tile fetched once/outer
    out = pl.pallas_call(
        _add_kernel,
        out_shape=jax.ShapeDtypeStruct((B, SD), x.dtype),
        grid=grid,
        in_specs=[
            pl.BlockSpec((tb, tl), lambda l, b: (b, l)),
            pl.BlockSpec((1, tl), lambda l, b: (0, l)),        # batch-constant -> resident
        ],
        out_specs=pl.BlockSpec((tb, tl), lambda l, b: (b, l)),
        compiler_params=pltpu.CompilerParams(
            dimension_semantics=("parallel", "parallel"),
            vmem_limit_bytes=vmem_limit,
        ),
    )(xf, pef)
    return out.reshape(B, S, D)


def _add_pe_table_fallback(x, pe):
    """3-D (Squeezed, seq-tile, D) layout when S*D is not a multiple of 128."""
    B, S, D = x.shape
    itemsize = x.dtype.itemsize
    cap_bytes, vmem_limit = _tile_budget()
    padded_lane = -(-D // _LANE) * _LANE
    ts = _pick_row_tile(S, padded_lane, itemsize, cap_bytes)
    assert ts * padded_lane * itemsize <= vmem_limit // 4, (
        "d_model too large for the fallback layout; use a lane-aligned d_model")
    return pl.pallas_call(
        _add_kernel,
        out_shape=jax.ShapeDtypeStruct((B, S, D), x.dtype),
        grid=(pl.cdiv(S, ts), B),                              # seq outer -> pe tile resident over batch
        in_specs=[
            pl.BlockSpec((pl.Squeezed(), ts, D), lambda s, b: (b, s, 0)),
            pl.BlockSpec((ts, D), lambda s, b: (s, 0)),
        ],
        out_specs=pl.BlockSpec((pl.Squeezed(), ts, D), lambda s, b: (b, s, 0)),
        compiler_params=pltpu.CompilerParams(
            dimension_semantics=("parallel", "parallel"),
            vmem_limit_bytes=vmem_limit,
        ),
    )(x, pe)


# ---------------------------------------------------------------------------
# Parameter / buffer setup (deterministic, matches nn.Module.__init__)
# ---------------------------------------------------------------------------
def _build_pe_table(d_model, num_rows, start=0, dtype=jnp.float32):
    position = jnp.arange(start, start + num_rows, dtype=jnp.float32)[:, None]
    div_term = jnp.exp(
        jnp.arange(0, d_model, 2, dtype=jnp.float32) * (-math.log(10000.0) / d_model)
    )
    pe = jnp.zeros((num_rows, d_model), dtype=jnp.float32)
    pe = pe.at[:, 0::2].set(jnp.sin(position * div_term))
    pe = pe.at[:, 1::2].set(jnp.cos(position * div_term))
    return pe.astype(dtype)


class PositionalEncodingPallas:
    def __init__(self, d_model, max_len=36):
        assert d_model % 2 == 0, "d_model must be even (as in the PyTorch module)"
        self.d_model = d_model
        self.max_len = max_len
        # corresponds to the PyTorch buffer `pe` with the leading unit dim squeezed
        self.pe = _build_pe_table(d_model, max_len)            # (max_len, d_model)
        self._pe_cache = {}                                    # cache of concrete PE constants

    def _extended_pe(self, seq_len, dtype):
        key = ("ext", seq_len, jnp.dtype(dtype).name)
        if key not in self._pe_cache:
            pe_ext = _build_pe_table(
                self.d_model, seq_len - self.max_len, start=self.max_len
            )
            self._pe_cache[key] = jnp.concatenate([self.pe, pe_ext], axis=0).astype(dtype)
        return self._pe_cache[key]

    def _row_pe(self, seq_len, dtype):
        key = ("row", seq_len, jnp.dtype(dtype).name)
        if key not in self._pe_cache:
            self._pe_cache[key] = self.pe[seq_len].astype(dtype)   # (d_model,)
        return self._pe_cache[key]

    def __call__(self, x):
        batch_size, seq_len, _ = x.shape
        if seq_len > self.max_len:
            pe = self._extended_pe(seq_len, x.dtype)               # (seq_len, d_model)
            return _add_pe_table(x, pe)
        if seq_len == self.max_len:
            # PyTorch's `pe[:, seq_len, :]` is out of bounds here; raise explicitly
            # instead of letting JAX silently clamp to the last row.
            raise IndexError(
                f"seq_len == max_len ({self.max_len}) indexes the PE table out of "
                "bounds, exactly as the reference PyTorch module would."
            )
        # PyTorch quirk: the single row pe[seq_len] is broadcast over every position.
        return _add_pe_row(x, self._row_pe(seq_len, x.dtype))


# ---------------------------------------------------------------------------
if __name__ == "__main__":
    d_model, max_len = 32, 36
    module = PositionalEncodingPallas(d_model, max_len)
    key = jax.random.PRNGKey(0)
    k1, k2 = jax.random.split(key)

    # --- path 1: seq_len < max_len (single-row broadcast quirk) ---
    B, S = 2, 8
    x = jax.random.normal(k1, (B, S, d_model), dtype=jnp.float32)
    out = jax.block_until_ready(module(x))
    ref = x + module.pe[S][None, None, :]
    assert out.shape == (B, S, d_model)
    assert jnp.allclose(out, ref, atol=1e-6), "mismatch vs reference (broadcast path)"

    # --- path 2: seq_len > max_len (per-position extended table) ---
    S2 = 40
    x2 = jax.random.normal(k2, (B, S2, d_model), dtype=jnp.float32)
    out2 = jax.block_until_ready(module(x2))
    pe_full = jnp.concatenate(
        [module.pe, _build_pe_table(d_model, S2 - max_len, start=max_len)], axis=0
    )
    ref2 = x2 + pe_full[None, :, :]
    assert out2.shape == (B, S2, d_model)
    assert jnp.allclose(out2, ref2, atol=1e-6), "mismatch vs reference (extended path)"

    print("KERNEL_OK")
</pallas_src>

<mosaic_0001>
module attributes {stable_mosaic.version = 11 : i64} {
  func.func @_add_kernel(%arg0: i32, %arg1: memref<1x512xf32, #tpu.memory_space<vmem>>, %arg2: memref<1x512xf32, #tpu.memory_space<vmem>>, %arg3: memref<1x512xf32, #tpu.memory_space<vmem>>) attributes {dimension_semantics = [#tpu.dimension_semantics<parallel>], iteration_bounds = array<i64: 1>, scalar_prefetch = 0 : i64, scratch_operands = 0 : i64, tpu.core_type = #tpu.core_type<tc>, window_params = [{transform_indices = @transform_0, window_bounds = array<i64: 1, 512>}, {pipeline_mode = #tpu.pipeline_mode<synchronous>, transform_indices = @transform_1, window_bounds = array<i64: 1, 512>}, {transform_indices = @transform_2, window_bounds = array<i64: 1, 512>}]} {
    %c0 = arith.constant 0 : index
    %c0_0 = arith.constant 0 : index
    %0 = vector.load %arg1[%c0, %c0_0] : memref<1x512xf32, #tpu.memory_space<vmem>>, vector<1x512xf32>
    %c0_1 = arith.constant 0 : index
    %c0_2 = arith.constant 0 : index
    %1 = vector.load %arg2[%c0_1, %c0_2] : memref<1x512xf32, #tpu.memory_space<vmem>>, vector<1x512xf32>
    %2 = arith.addf %0, %1 : vector<1x512xf32>
    %c0_3 = arith.constant 0 : index
    %c0_4 = arith.constant 0 : index
    %3 = vector.load %arg3[%c0_3, %c0_4] : memref<1x512xf32, #tpu.memory_space<vmem>>, vector<1x512xf32>
    tpu.vector_store %arg3[%c0_3, %c0_4], %2 {strides = array<i32>} : memref<1x512xf32, #tpu.memory_space<vmem>>, vector<1x512xf32>,
    return
  }
  func.func @transform_0(%arg0: i32) -> (i32, i32) {
    %c0_i32 = arith.constant 0 : i32
    %c0_i32_0 = arith.constant 0 : i32
    return %arg0, %c0_i32 : i32, i32
  }
  func.func @transform_1(%arg0: i32) -> (i32, i32) {
    %c0_i32 = arith.constant 0 : i32
    %c0_i32_0 = arith.constant 0 : i32
    %c0_i32_1 = arith.constant 0 : i32
    return %c0_i32, %c0_i32_0 : i32, i32
  }
  func.func @transform_2(%arg0: i32) -> (i32, i32) {
    %c0_i32 = arith.constant 0 : i32
    %c0_i32_0 = arith.constant 0 : i32
    return %arg0, %c0_i32 : i32, i32
  }
}

</mosaic_0001>

<llo_original>
// kernel: tpu_custom_call.1
$region0: #{tpu_custom_call.1}
  #allocation0 [shape = 'u32[]', space=smem, size = 0x4, offset = 0x4, fixed_abs, tag = 'smem constant byte address 0x4 - core index']
  #allocation1 [shape = 'u32[144,128]{1,0:T(1,128)}', space=vmem, size = 0x12000, scoped, tag = 'internal scratch']
  %s0 = inlined_call_operand.hbm [shape: f32[1,512], index: 0, kind: input, shape index: {}]
  %s1 = inlined_call_operand.hbm [shape: f32[1,512], index: 1, kind: input, shape index: {}]
  %s2 = inlined_call_operand.hbm [shape: f32[1,512], index: 2, kind: output, shape index: {}]
  %s3 = sld [smem:[#allocation0]]
  $region26: #{tpu_custom_call.1} parent=0
    _
  %s5 = ssub.s32 1, %s3
  %s6 = scalar_select 0, %s5, %s3
  $region1: #{tpu_custom_call.1} parent=0
    #allocation2 [shape = 'u8[2048]{0}', space=vmem, size = 0x800, scoped, tag = 'input window, operand 0, single buffered']
    #allocation3 [shape = 's32[1]{0}', space=sflag, size = 0x4, scoped, tag = 'scoped memory for tpu_custom_call.1']
    #allocation4 [shape = 's32[1]{0}', space=sflag, size = 0x4, scoped, tag = 'scoped memory for tpu_custom_call.1']
    #allocation5 [shape = 'u8[2048]{0}', space=vmem, size = 0x800, scoped, tag = 'input window, operand 1, single buffered']
    #allocation6 [shape = 's32[1]{0}', space=sflag, size = 0x4, scoped, tag = 'scoped memory for tpu_custom_call.1']
    #allocation7 [shape = 'u8[2048]{0}', space=vmem, size = 0x800, scoped, tag = 'output window, operand 0, single buffered']
    %7 = vsyncpa [#allocation3], 0
    %8 = vsyncpa [#allocation6], 0
    %9 = vsyncpa [#allocation4], 0
    // Predicated region
    $region2: #{tpu_custom_call.1} parent=1 // pred_check
      _
    $region3: #{tpu_custom_call.1} parent=1 // pred_check_branch
      %11 = sbr.rel (0) target = $region5
    $region4: #{tpu_custom_call.1} parent=1 // pred_region
      %s13 = ssub.s32 64, 64
      %14 = vsyncadd [#allocation3], %s13
      %s16 = sshll.u32 [#allocation2], 4
      %s17 = int_to_ptr.vmem [resolvable:$true] %s16
      %19 = dma.hbm_to_vmem [thread:$0]  %s0, 64, %s17, [#allocation3]
    $region5: #{tpu_custom_call.1} parent=1 // pred_fallthru
      _
    // Predicated region
    $region6: #{tpu_custom_call.1} parent=1 // pred_check
      _
    $region7: #{tpu_custom_call.1} parent=1 // pred_check_branch
      %21 = sbr.rel (0) target = $region9
    $region8: #{tpu_custom_call.1} parent=1 // pred_region
      %s23 = ssub.s32 64, 64
      %24 = vsyncadd [#allocation6], %s23
      %s26 = sshll.u32 [#allocation5], 4
      %s27 = int_to_ptr.vmem [resolvable:$true] %s26
      %29 = dma.hbm_to_vmem [thread:$0]  %s1, 64, %s27, [#allocation6]
    $region9: #{tpu_custom_call.1} parent=1 // pred_fallthru
      _
    // Predicated region
    $region10: #{tpu_custom_call.1} parent=1 // pred_check
      _
    $region11: #{tpu_custom_call.1} parent=1 // pred_check_branch
      %31 = sbr.rel (0) target = $region13
    $region12: #{tpu_custom_call.1} parent=1 // pred_region
      %32 = dma.done [#allocation3], 64
    $region13: #{tpu_custom_call.1} parent=1 // pred_fallthru
      _
    // Predicated region
    $region14: #{tpu_custom_call.1} parent=1 // pred_check
      _
    $region15: #{tpu_custom_call.1} parent=1 // pred_check_branch
      %34 = sbr.rel (0) target = $region17
    $region16: #{tpu_custom_call.1} parent=1 // pred_region
      %35 = dma.done [#allocation6], 64
    $region17: #{tpu_custom_call.1} parent=1 // pred_fallthru
      _
    %v36 = vld [vmem:[#allocation2] sm:$0xf]
    %v37 = vld [vmem:[#allocation5] sm:$0xf]
    %v38 = vadd.f32 %v36, %v37
    %v39 = vlaneseq
    %vm40 = vcmp.ge.s32.totalorder %v39, 0
    %vm41 = vcmp.lt.s32.totalorder %v39, 512
    %vm42 = vmand %vm40, %vm41
    %43 = vst.msk [vmem:[#allocation7] sm:$0xf] %vm42, %v38
    // Predicated region
    $region18: #{tpu_custom_call.1} parent=1 // pred_check
      _
    $region19: #{tpu_custom_call.1} parent=1 // pred_check_branch
      %45 = sbr.rel (0) target = $region21
    $region20: #{tpu_custom_call.1} parent=1 // pred_region
      %s47 = ssub.s32 64, 64
      %48 = vsyncadd [#allocation4], %s47
      %s50 = sshll.u32 [#allocation7], 4
      %s51 = int_to_ptr.vmem [resolvable:$true] %s50
      %53 = dma.vmem_to_hbm [thread:$0]  %s51, 64, %s2, [#allocation4]
    $region21: #{tpu_custom_call.1} parent=1 // pred_fallthru
      _
    // Predicated region
    $region22: #{tpu_custom_call.1} parent=1 // pred_check
      _
    $region23: #{tpu_custom_call.1} parent=1 // pred_check_branch
      %55 = sbr.rel (0) target = $region25
    $region24: #{tpu_custom_call.1} parent=1 // pred_region
      %56 = dma.done [#allocation4], 64
    $region25: #{tpu_custom_call.1} parent=1 // pred_fallthru
      _
    %57 = vsyncpa [#allocation3], 1
    %58 = vsyncpa [#allocation6], 1
    %59 = vsyncpa [#allocation4], 1

</llo_original>
